<compile_context>
chip_gen: v6e
topology: v6e:2x2x1
jax: 0.10.0
libtpu: 0.0.40
codegen_flags: <defaults>
</compile_context>

<pallas_src>
import functools
import math

import jax
import jax.numpy as jnp
from jax.experimental import pallas as pl
from jax.experimental.pallas import tpu as pltpu

LANE = 128  # pad hidden dim to this for lane-dense stores
# Keep resident XW panel (incl. double buffer) under this budget; otherwise stream it per k-tile.
_XW_RESIDENT_BUDGET_BYTES = 8 * 1024 * 1024


def _round_up(x, m):
    return ((x + m - 1) // m) * m


def _default_tile():
    """Bigger tiles on v6e/v7x (fast HBM -> 512 tiles are overhead-bound); 512 elsewhere."""
    try:
        kind = jax.devices()[0].device_kind.lower()
    except Exception:
        return 512
    if ("v6" in kind) or ("v7" in kind):
        return 1024
    return 512


def _choose_tile(n, default):
    """Clamp the default tile down for small graphs so we don't over-pad A_hat."""
    t = default
    n_pad_lane = _round_up(max(n, 1), LANE)
    while t > LANE and (t // 2) >= n_pad_lane:
        t //= 2
    return t


# --------------------- main kernel: A_hat @ XW + bias, then PReLU ------------------------

def gcn_prelu_kernel(ahat_ref, xw_ref, b_ref, alpha_ref, out_ref, *, tk, xw_resident):
    k = pl.program_id(1)

    @pl.when(k == 0)
    def _():
        out_ref[...] = jnp.zeros_like(out_ref)

    if xw_resident:
        # Whole XW panel lives in VMEM (constant block index); slice the current k-tile.
        start = pl.multiple_of(k * tk, LANE)
        xw_tile = xw_ref[pl.ds(start, tk), :]
    else:
        xw_tile = xw_ref[...]

    # Pure MXU accumulate (bf16 operands, f32 accumulation straight into the resident out block).
    out_ref[...] += jnp.dot(ahat_ref[...], xw_tile, preferred_element_type=jnp.float32)

    @pl.when(k == pl.num_programs(1) - 1)
    def _():
        h = out_ref[...] + b_ref[...]                      # bias broadcast [1, Hp] -> [tm, Hp]
        out_ref[...] = jnp.where(h > 0, h, alpha_ref[...] * h)


def encoder_forward(a_hat_padded, x, w, b, alpha, *, tm, tk):
    """y = PReLU(A_hat @ (x @ w) + b).

    a_hat_padded: [n_pad_m, n_pad_k] bf16, pre-padded normalized adjacency (see pad_adj_bf16).
    Returns [N, H] float32.
    """
    n, c_in = x.shape
    h_dim = w.shape[1]
    n_pad_m, n_pad_k = a_hat_padded.shape
    assert tm % LANE == 0 and tk % LANE == 0, "tiles must be multiples of 128"
    assert n_pad_m % tm == 0 and n_pad_k % tk == 0, "padded A_hat must be tile-divisible"
    assert n_pad_m >= n and n_pad_k >= n

    h_pad = _round_up(h_dim, LANE)

    # Tiny GEMM (c_in ~ 16): let XLA do it; keep the result bf16 to halve its HBM read.
    x_p = jnp.zeros((n_pad_k, c_in), jnp.float32).at[:n, :].set(x)
    w_p = jnp.zeros((c_in, h_pad), jnp.float32).at[:, :h_dim].set(w)
    xw = jnp.dot(x_p, w_p).astype(jnp.bfloat16)            # [n_pad_k, h_pad]

    b_p = jnp.zeros((1, h_pad), jnp.float32).at[0, :h_dim].set(b)
    alpha_p = jnp.zeros((1, h_pad), jnp.float32).at[0, :h_dim].set(alpha)

    # Hold the whole XW panel resident in VMEM when it fits (counting double-buffering).
    xw_resident = (2 * n_pad_k * h_pad * 2) <= _XW_RESIDENT_BUDGET_BYTES
    if xw_resident:
        xw_spec = pl.BlockSpec((n_pad_k, h_pad), lambda i, k: (0, 0))
    else:
        xw_spec = pl.BlockSpec((tk, h_pad), lambda i, k: (k, 0))

    grid = (n_pad_m // tm, n_pad_k // tk)
    kernel = functools.partial(gcn_prelu_kernel, tk=tk, xw_resident=xw_resident)

    out = pl.pallas_call(
        kernel,
        out_shape=jax.ShapeDtypeStruct((n_pad_m, h_pad), jnp.float32),
        grid=grid,
        in_specs=[
            pl.BlockSpec((tm, tk), lambda i, k: (i, k)),      # A_hat tile (dominant HBM stream)
            xw_spec,                                          # XW panel (resident) or tile
            pl.BlockSpec((1, h_pad), lambda i, k: (0, 0)),    # bias
            pl.BlockSpec((1, h_pad), lambda i, k: (0, 0)),    # prelu alpha
        ],
        out_specs=pl.BlockSpec((tm, h_pad), lambda i, k: (i, 0)),  # revisited across k -> resident
        compiler_params=pltpu.CompilerParams(
            dimension_semantics=("parallel", "arbitrary"),
            vmem_limit_bytes=32 * 1024 * 1024,
        ),
    )(a_hat_padded, xw, b_p, alpha_p)

    return out[:n, :h_dim]


# ------------------------------ graph preprocessing (one-time) ---------------------------

def build_gcn_norm_adj(edge_index, num_nodes):
    """Dense A_hat = D^{-1/2} (A + I_missing) D^{-1/2}, matching GCNConv's gcn_norm
    (add_remaining_self_loops: a self-loop is added only where one is missing)."""
    src, dst = edge_index[0], edge_index[1]
    a = jnp.zeros((num_nodes, num_nodes), jnp.float32)
    a = a.at[dst, src].add(1.0)                              # aggregate at dst from src
    diag = jnp.diagonal(a)
    a = a + jnp.diag(jnp.where(diag > 0, 0.0, 1.0))          # add self-loops only where missing
    deg = a.sum(axis=1)
    dinv = jnp.where(deg > 0, jax.lax.rsqrt(deg), 0.0)
    return dinv[:, None] * a * dinv[None, :]


def pad_adj_bf16(a_hat, num_nodes, *, tm, tk):
    """One-time pad + bf16 cast of A_hat to [round_up(N, tm), round_up(N, tk)] (cached=True style)."""
    n_pad_m = _round_up(num_nodes, tm)
    n_pad_k = _round_up(num_nodes, tk)
    out = jnp.zeros((n_pad_m, n_pad_k), jnp.bfloat16)
    return out.at[:num_nodes, :num_nodes].set(a_hat.astype(jnp.bfloat16))


if __name__ == "__main__":
    N = 256           # nodes
    C_IN = 16         # in_channels
    H = 32            # hidden_channels

    key = jax.random.PRNGKey(0)
    k_x, k_w, k_src, k_dst = jax.random.split(key, 4)

    # Node features [N, C_in]
    x = jax.random.normal(k_x, (N, C_IN), dtype=jnp.float32)

    # Deterministic small graph: a ring plus random extra edges
    ring_src = jnp.arange(N, dtype=jnp.int32)
    ring_dst = (ring_src + 1) % N
    n_extra = 64
    extra_src = jax.random.randint(k_src, (n_extra,), 0, N, dtype=jnp.int32)
    extra_dst = jax.random.randint(k_dst, (n_extra,), 0, N, dtype=jnp.int32)
    edge_index = jnp.stack(
        [jnp.concatenate([ring_src, extra_src]), jnp.concatenate([ring_dst, extra_dst])],
        axis=0,
    )

    # Parameters (GCNConv: glorot weight + zero bias; PReLU(hidden_channels): alpha = 0.25)
    limit = jnp.sqrt(6.0 / (C_IN + H))
    w = jax.random.uniform(k_w, (C_IN, H), jnp.float32, -limit, limit)
    b = jnp.zeros((H,), jnp.float32)
    alpha = jnp.full((H,), 0.25, jnp.float32)

    # Tile choice: clamp the per-chip default down for this tiny graph, but force 128 so the
    # (rows, contraction) grid is non-trivial even at N=256.
    tile = _choose_tile(N, _default_tile())
    tm = tk = min(tile, 128)

    # One-time graph preprocessing (outside the per-call path), analogous to GCNConv(cached=True).
    a_hat = build_gcn_norm_adj(edge_index, N)
    a_hat_p = pad_adj_bf16(a_hat, N, tm=tm, tk=tk)
    a_hat_p = jax.block_until_ready(a_hat_p)

    out = encoder_forward(a_hat_p, x, w, b, alpha, tm=tm, tk=tk)
    jax.block_until_ready(out)

    # Sanity check against a plain-JAX f32 reference (bf16 operands -> slightly looser tol)
    ref_h = a_hat @ (x @ w) + b[None, :]
    ref = jnp.where(ref_h > 0, ref_h, alpha[None, :] * ref_h)
    assert out.shape == ref.shape
    max_err = jnp.max(jnp.abs(out - ref))
    assert jnp.allclose(out, ref, atol=2e-2, rtol=2e-2), f"max abs err {max_err}"

    print("KERNEL_OK")
</pallas_src>

<mosaic_0001>
module attributes {stable_mosaic.version = 11 : i64} {
  func.func @gcn_prelu_kernel(%arg0: i32, %arg1: i32, %arg2: memref<128x128xbf16, #tpu.memory_space<vmem>>, %arg3: memref<256x128xbf16, #tpu.memory_space<vmem>>, %arg4: memref<1x128xf32, #tpu.memory_space<vmem>>, %arg5: memref<1x128xf32, #tpu.memory_space<vmem>>, %arg6: memref<128x128xf32, #tpu.memory_space<vmem>>) attributes {dimension_semantics = [#tpu.dimension_semantics<parallel>, #tpu.dimension_semantics<arbitrary>], iteration_bounds = array<i64: 2, 2>, scalar_prefetch = 0 : i64, scratch_operands = 0 : i64, tpu.core_type = #tpu.core_type<tc>, window_params = [{transform_indices = @transform_0, window_bounds = array<i64: 128, 128>}, {pipeline_mode = #tpu.pipeline_mode<synchronous>, transform_indices = @transform_1, window_bounds = array<i64: 256, 128>}, {pipeline_mode = #tpu.pipeline_mode<synchronous>, transform_indices = @transform_2, window_bounds = array<i64: 1, 128>}, {pipeline_mode = #tpu.pipeline_mode<synchronous>, transform_indices = @transform_3, window_bounds = array<i64: 1, 128>}, {transform_indices = @transform_4, window_bounds = array<i64: 128, 128>}]} {
    %c0_i32 = arith.constant 0 : i32
    %0 = arith.cmpi eq, %arg1, %c0_i32 : i32
    %1 = arith.extui %0 : i1 to i32
    %c0_i32_0 = arith.constant 0 : i32
    %2 = arith.cmpi ne, %1, %c0_i32_0 : i32
    scf.if %2 {
      %cst_8 = arith.constant 0.000000e+00 : f32
      %15 = vector.broadcast %cst_8 : f32 to vector<128x128xf32>
      %c0_9 = arith.constant 0 : index
      %c0_10 = arith.constant 0 : index
      %16 = vector.load %arg6[%c0_9, %c0_10] : memref<128x128xf32, #tpu.memory_space<vmem>>, vector<128x128xf32>
      tpu.vector_store %arg6[%c0_9, %c0_10], %15 {strides = array<i32>} : memref<128x128xf32, #tpu.memory_space<vmem>>, vector<128x128xf32>,
    } else {
    }
    %c128_i32 = arith.constant 128 : i32
    %3 = arith.muli %arg1, %c128_i32 : i32
    %4 = tpu.assume_multiple %3, 128 : i32
    %5 = arith.index_cast %4 : i32 to index
    %c0 = arith.constant 0 : index
    %6 = vector.load %arg3[%5, %c0] : memref<256x128xbf16, #tpu.memory_space<vmem>>, vector<128x128xbf16>
    %c0_1 = arith.constant 0 : index
    %c0_2 = arith.constant 0 : index
    %7 = vector.load %arg6[%c0_1, %c0_2] : memref<128x128xf32, #tpu.memory_space<vmem>>, vector<128x128xf32>
    %c0_3 = arith.constant 0 : index
    %c0_4 = arith.constant 0 : index
    %8 = vector.load %arg2[%c0_3, %c0_4] : memref<128x128xbf16, #tpu.memory_space<vmem>>, vector<128x128xbf16>
    %cst = arith.constant dense<0.000000e+00> : vector<128x128xf32>
    %9 = tpu.matmul %8, %6, %cst {dimension_numbers = #tpu.dot_dimension_numbers<[1], [0], [0], [1], [0, 0, 1, 1], [], []>} : vector<128x128xbf16>, vector<128x128xbf16>, vector<128x128xf32> -> vector<128x128xf32>
    %10 = arith.addf %7, %9 : vector<128x128xf32>
    %c0_5 = arith.constant 0 : index
    %c0_6 = arith.constant 0 : index
    %11 = vector.load %arg6[%c0_5, %c0_6] : memref<128x128xf32, #tpu.memory_space<vmem>>, vector<128x128xf32>
    tpu.vector_store %arg6[%c0_5, %c0_6], %10 {strides = array<i32>} : memref<128x128xf32, #tpu.memory_space<vmem>>, vector<128x128xf32>,
    %c1_i32 = arith.constant 1 : i32
    %12 = arith.cmpi eq, %arg1, %c1_i32 : i32
    %13 = arith.extui %12 : i1 to i32
    %c0_i32_7 = arith.constant 0 : i32
    %14 = arith.cmpi ne, %13, %c0_i32_7 : i32
    scf.if %14 {
      %c0_8 = arith.constant 0 : index
      %c0_9 = arith.constant 0 : index
      %15 = vector.load %arg6[%c0_8, %c0_9] : memref<128x128xf32, #tpu.memory_space<vmem>>, vector<128x128xf32>
      %c0_10 = arith.constant 0 : index
      %c0_11 = arith.constant 0 : index
      %16 = vector.load %arg4[%c0_10, %c0_11] : memref<1x128xf32, #tpu.memory_space<vmem>>, vector<1x128xf32>
      %17 = vector.broadcast %16 : vector<1x128xf32> to vector<128x128xf32>
      %18 = arith.addf %15, %17 : vector<128x128xf32>
      %cst_12 = arith.constant 0.000000e+00 : f32
      %19 = vector.broadcast %cst_12 : f32 to vector<128x128xf32>
      %20 = arith.cmpf ogt, %18, %19 : vector<128x128xf32>
      %c0_13 = arith.constant 0 : index
      %c0_14 = arith.constant 0 : index
      %21 = vector.load %arg5[%c0_13, %c0_14] : memref<1x128xf32, #tpu.memory_space<vmem>>, vector<1x128xf32>
      %22 = vector.broadcast %21 : vector<1x128xf32> to vector<128x128xf32>
      %23 = arith.mulf %22, %18 : vector<128x128xf32>
      %24 = arith.select %20, %18, %23 : vector<128x128xi1>, vector<128x128xf32>
      %c0_15 = arith.constant 0 : index
      %c0_16 = arith.constant 0 : index
      %25 = vector.load %arg6[%c0_15, %c0_16] : memref<128x128xf32, #tpu.memory_space<vmem>>, vector<128x128xf32>
      tpu.vector_store %arg6[%c0_15, %c0_16], %24 {strides = array<i32>} : memref<128x128xf32, #tpu.memory_space<vmem>>, vector<128x128xf32>,
    } else {
    }
    return
  }
  func.func @transform_0(%arg0: i32, %arg1: i32) -> (i32, i32) {
    %c0_i32 = arith.constant 0 : i32
    return %arg0, %arg1 : i32, i32
  }
  func.func @transform_1(%arg0: i32, %arg1: i32) -> (i32, i32) {
    %c0_i32 = arith.constant 0 : i32
    %c0_i32_0 = arith.constant 0 : i32
    %c0_i32_1 = arith.constant 0 : i32
    return %c0_i32, %c0_i32_0 : i32, i32
  }
  func.func @transform_2(%arg0: i32, %arg1: i32) -> (i32, i32) {
    %c0_i32 = arith.constant 0 : i32
    %c0_i32_0 = arith.constant 0 : i32
    %c0_i32_1 = arith.constant 0 : i32
    return %c0_i32, %c0_i32_0 : i32, i32
  }
  func.func @transform_3(%arg0: i32, %arg1: i32) -> (i32, i32) {
    %c0_i32 = arith.constant 0 : i32
    %c0_i32_0 = arith.constant 0 : i32
    %c0_i32_1 = arith.constant 0 : i32
    return %c0_i32, %c0_i32_0 : i32, i32
  }
  func.func @transform_4(%arg0: i32, %arg1: i32) -> (i32, i32) {
    %c0_i32 = arith.constant 0 : i32
    %c0_i32_0 = arith.constant 0 : i32
    return %arg0, %c0_i32 : i32, i32
  }
}

</mosaic_0001>

<llo_original>
// kernel: tpu_custom_call.1
$region0: #{tpu_custom_call.1}
  #allocation0 [shape = 'u32[]', space=smem, size = 0x4, offset = 0x4, fixed_abs, tag = 'smem constant byte address 0x4 - core index']
  #allocation1 [shape = 'u32[144,128]{1,0:T(1,128)}', space=vmem, size = 0x12000, scoped, tag = 'internal scratch']
  %s0 = inlined_call_operand.hbm [shape: bf16[256,256], index: 0, kind: input, shape index: {}]
  %s1 = inlined_call_operand.hbm [shape: bf16[256,128], index: 1, kind: input, shape index: {}]
  %s2 = inlined_call_operand.vmem [shape: f32[1,128], index: 2, kind: input, shape index: {}]
  %s3 = inlined_call_operand.vmem [shape: f32[1,128], index: 3, kind: input, shape index: {}]
  %s4 = inlined_call_operand.hbm [shape: f32[256,128], index: 4, kind: output, shape index: {}]
  %s5 = sld [smem:[#allocation0]]
  $region65: #{tpu_custom_call.1} parent=0
    _
  %s7 = ssub.s32 1, %s5
  %s8 = scalar_select 0, %s7, %s5
  $region1: #{tpu_custom_call.1} parent=0
    #allocation2 [shape = 'u8[65536]{0}', space=vmem, size = 0x10000, scoped, tag = 'input window, operand 0']
    #allocation3 [shape = 's32[2]{0}', space=sflag, size = 0x8, scoped, tag = 'scoped memory for tpu_custom_call.1']
    #allocation4 [shape = 's32[2]{0}', space=sflag, size = 0x8, scoped, tag = 'scoped memory for tpu_custom_call.1']
    #allocation5 [shape = 'u8[65536]{0}', space=vmem, size = 0x10000, scoped, tag = 'input window, operand 1, single buffered']
    #allocation6 [shape = 's32[1]{0}', space=sflag, size = 0x4, scoped, tag = 'scoped memory for tpu_custom_call.1']
    #allocation7 [shape = 'u8[131072]{0}', space=vmem, size = 0x20000, scoped, tag = 'output window, operand 0']
    %9 = vsyncpa [#allocation3], 0
    %s10 = scalar_lea.sflag [#allocation3], 1
    %11 = vsyncpa %s10, 0
    %12 = vsyncpa [#allocation6], 0
    %13 = vsyncpa [#allocation4], 0
    %s14 = scalar_lea.sflag [#allocation4], 1
    %15 = vsyncpa %s14, 0
    loop: start=0, step=1, limit=6
    $region2: #{tpu_custom_call.1} parent=1 // loop_pre_header
      _
    $region3: #{tpu_custom_call.1} parent=1 // loop_header
      %s17 = sphi 0, %s21
      %p18 = scmp.ge.s32.totalorder %s17, 6
      %s24 = sphi 0, %s36
      %s25 = sphi 0, %s32
      %s26 = sphi 0, %s24
      %s27 = sphi 0, %s25
      %s28 = sphi 0, %s26
      %s29 = sphi 0, %s27
      %s41 = sphi 0, %s43
      %s44 = sphi 0, %s41
      %s45 = sphi 0, %s44
      %s61 = sphi 0, %s45
      %s65 = sphi 0, %s65
      %s67 = sphi 0, %s65
      %s68 = sphi 0, %s67
      %s82 = sphi 0, %s68
      %s86 = sphi 0, %s86
      %s88 = sphi 0, %s86
      %s89 = sphi 0, %s88
      %s103 = sphi 0, %s89
      %s107 = sphi 0, %s107
      %s109 = sphi 0, %s107
      %s110 = sphi 0, %s109
      %s124 = sphi 0, %s110
      %s130 = sphi 0, %s132
      %s133 = sphi 0, %s130
      %s134 = sphi 0, %s133
      %s150 = sphi 0, %s134
    $region4: #{tpu_custom_call.1} parent=1 // loop_header_branch
      %20 = sbr.rel (%p18) target = $region8
    $region5: #{tpu_custom_call.1} parent=1 // loop_body
      %s22 = ssub.s32 %s17, 1
      %s23 = ssub.s32 %s17, 2
      %s30 = sadd.s32 1, %s25
      %p31 = scmp.ge.s32.totalorder %s30, 2
      %s32 = scalar_select %p31, 0, %s30
      %s33 = sadd.s32 1, %s24
      %s34 = scalar_select %p31, %s33, %s24
      %p35 = scmp.ge.s32.totalorder %s34, 2
      %s36 = scalar_select %p35, 0, %s34
      %s37 = ssub.s32 %s24, %s36
      %s38 = ssub.s32 %s25, %s32
      %s39 = sor.u32 %s37, %s38
      %p40 = scmp.eq.s32.totalorder %s39, 0
      %s42 = sadd.s32 %s41, 1
      %s43 = scalar_select %p40, %s41, %s42
      %p46 = pneg %p40
      %p47 = scmp.eq.s32.totalorder %s17, 3
      %p48 = por %p46, %p47
      %p49 = scmp.ne.s32.totalorder %s41, %s44
      %p50 = scmp.eq.s32.totalorder %s17, 0
      %p51 = por %p49, %p50
      %p52 = scmp.ne.s32.totalorder %s41, %s44
      %p53 = scmp.eq.s32.totalorder %s22, 3
      %p54 = por %p52, %p53
      %p55 = scmp.ne.s32.totalorder %s44, %s45
      %p56 = scmp.eq.s32.totalorder %s22, 0
      %p57 = por %p55, %p56
      %p58 = scmp.ne.s32.totalorder %s44, %s45
      %p59 = scmp.eq.s32.totalorder %s23, 3
      %p60 = por %p58, %p59
      %p62 = scmp.ne.s32.totalorder %s45, %s61
      %p63 = scmp.eq.s32.totalorder %s23, 0
      %p64 = por %p62, %p63
      %s66 = sadd.s32 %s65, 1
      %p69 = scmp.eq.s32.totalorder %s17, 3
      %p70 = scmp.ne.s32.totalorder %s65, %s67
      %p71 = scmp.eq.s32.totalorder %s17, 0
      %p72 = por %p70, %p71
      %p73 = scmp.ne.s32.totalorder %s65, %s67
      %p74 = scmp.eq.s32.totalorder %s22, 3
      %p75 = por %p73, %p74
      %p76 = scmp.ne.s32.totalorder %s67, %s68
      %p77 = scmp.eq.s32.totalorder %s22, 0
      %p78 = por %p76, %p77
      %p79 = scmp.ne.s32.totalorder %s67, %s68
      %p80 = scmp.eq.s32.totalorder %s23, 3
      %p81 = por %p79, %p80
      %p83 = scmp.ne.s32.totalorder %s68, %s82
      %p84 = scmp.eq.s32.totalorder %s23, 0
      %p85 = por %p83, %p84
      %s87 = sadd.s32 %s86, 1
      %p90 = scmp.eq.s32.totalorder %s17, 3
      %p91 = scmp.ne.s32.totalorder %s86, %s88
      %p92 = scmp.eq.s32.totalorder %s17, 0
      %p93 = por %p91, %p92
      %p94 = scmp.ne.s32.totalorder %s86, %s88
      %p95 = scmp.eq.s32.totalorder %s22, 3
      %p96 = por %p94, %p95
      %p97 = scmp.ne.s32.totalorder %s88, %s89
      %p98 = scmp.eq.s32.totalorder %s22, 0
      %p99 = por %p97, %p98
      %p100 = scmp.ne.s32.totalorder %s88, %s89
      %p101 = scmp.eq.s32.totalorder %s23, 3
      %p102 = por %p100, %p101
      %p104 = scmp.ne.s32.totalorder %s89, %s103
      %p105 = scmp.eq.s32.totalorder %s23, 0
      %p106 = por %p104, %p105
      %s108 = sadd.s32 %s107, 1
      %p111 = scmp.eq.s32.totalorder %s17, 3
      %p112 = scmp.ne.s32.totalorder %s107, %s109
      %p113 = scmp.eq.s32.totalorder %s17, 0
      %p114 = por %p112, %p113
      %p115 = scmp.ne.s32.totalorder %s107, %s109
      %p116 = scmp.eq.s32.totalorder %s22, 3
      %p117 = por %p115, %p116
      %p118 = scmp.ne.s32.totalorder %s109, %s110
      %p119 = scmp.eq.s32.totalorder %s22, 0
      %p120 = por %p118, %p119
      %p121 = scmp.ne.s32.totalorder %s109, %s110
      %p122 = scmp.eq.s32.totalorder %s23, 3
      %p123 = por %p121, %p122
      %p125 = scmp.ne.s32.totalorder %s110, %s124
      %p126 = scmp.eq.s32.totalorder %s23, 0
      %p127 = por %p125, %p126
      %s128 = ssub.s32 %s24, %s36
      %p129 = scmp.eq.s32.totalorder %s128, 0
      %s131 = sadd.s32 %s130, 1
      %s132 = scalar_select %p129, %s130, %s131
      %p135 = pneg %p129
      %p136 = scmp.eq.s32.totalorder %s17, 3
      %p137 = por %p135, %p136
      %p138 = scmp.ne.s32.totalorder %s130, %s133
      %p139 = scmp.eq.s32.totalorder %s17, 0
      %p140 = por %p138, %p139
      %p141 = scmp.ne.s32.totalorder %s130, %s133
      %p142 = scmp.eq.s32.totalorder %s22, 3
      %p143 = por %p141, %p142
      %p144 = scmp.ne.s32.totalorder %s133, %s134
      %p145 = scmp.eq.s32.totalorder %s22, 0
      %p146 = por %p144, %p145
      %p147 = scmp.ne.s32.totalorder %s133, %s134
      %p148 = scmp.eq.s32.totalorder %s23, 3
      %p149 = por %p147, %p148
      %p151 = scmp.ne.s32.totalorder %s134, %s150
      %p152 = scmp.eq.s32.totalorder %s23, 0
      %p153 = por %p151, %p152
      %p154 = scmp.le.s32.totalorder 1, %s17
      %p155 = scmp.lt.s32.totalorder %s17, 5
      %p156 = pnand %p154, %p155
      %p157 = pneg %p156
      // Predicated region
      $region9: #{tpu_custom_call.1} parent=5 // pred_check
        _
      $region10: #{tpu_custom_call.1} parent=5 // pred_check_branch
        %159 = sbr.rel (%p156) target = $region12
      $region11: #{tpu_custom_call.1} parent=5 // pred_region
        %s160 = ssub.s32 %s17, 1
        // Predicated region
        $region13: #{tpu_custom_call.1} parent=11 // pred_check
          %p161 = pneg %p78
        $region14: #{tpu_custom_call.1} parent=11 // pred_check_branch
          %163 = sbr.rel (%p161) target = $region16
        $region15: #{tpu_custom_call.1} parent=11 // pred_region
          %s165 = ssub.s32 2048, 2048
          %166 = vsyncadd [#allocation6], %s165
          %s167 = sshll.u32 [#allocation5], 4
          %s168 = int_to_ptr.vmem [resolvable:$true] %s167
          %173 = dma.hbm_to_vmem [thread:$0]  %s1, 2048, %s168, [#allocation6], 64, 64, 4
        $region16: #{tpu_custom_call.1} parent=11 // pred_fallthru
          _
        // Predicated region
        $region17: #{tpu_custom_call.1} parent=11 // pred_check
          %p174 = pneg %p99
        $region18: #{tpu_custom_call.1} parent=11 // pred_check_branch
          %176 = sbr.rel (%p174) target = $region20
        $region19: #{tpu_custom_call.1} parent=11 // pred_region
          _
        $region20: #{tpu_custom_call.1} parent=11 // pred_fallthru
          _
        // Predicated region
        $region21: #{tpu_custom_call.1} parent=11 // pred_check
          %p177 = pneg %p120
        $region22: #{tpu_custom_call.1} parent=11 // pred_check_branch
          %179 = sbr.rel (%p177) target = $region24
        $region23: #{tpu_custom_call.1} parent=11 // pred_region
          _
        $region24: #{tpu_custom_call.1} parent=11 // pred_fallthru
          _
      $region12: #{tpu_custom_call.1} parent=5 // pred_fallthru
        _
      %p180 = scmp.lt.s32.totalorder %s17, 4
      // Predicated region
      $region25: #{tpu_custom_call.1} parent=5 // pred_check
        %p181 = pneg %p180
      $region26: #{tpu_custom_call.1} parent=5 // pred_check_branch
        %183 = sbr.rel (%p181) target = $region28
      $region27: #{tpu_custom_call.1} parent=5 // pred_region
        // Predicated region
        $region29: #{tpu_custom_call.1} parent=27 // pred_check
          %p184 = pneg %p51
        $region30: #{tpu_custom_call.1} parent=27 // pred_check_branch
          %186 = sbr.rel (%p184) target = $region32
        $region31: #{tpu_custom_call.1} parent=27 // pred_region
          %s187 = sand.u32 %s41, 1
          %s188 = scalar_lea.sflag [#allocation3], %s187
          %s189 = sand.u32 %s41, 1
          %s190 = smul.addr %s189, 64
          %s191 = scalar_lea.vmem [#allocation2], %s190
          %s192 = smul.u32 16, %s24
          %s194 = ssub.s32 1024, 1024
          %195 = vsyncadd %s188, %s194
          %s196 = smul.addr %s192, 2
          %s197 = sadd.s32 %s25, %s196
          %s198 = smul.addr %s197, 64
          %s199 = scalar_lea.hbm %s0, %s198
          %s200 = sshll.u32 %s191, 4
          %s201 = int_to_ptr.vmem [resolvable:$true] %s200
          %206 = dma.hbm_to_vmem [thread:$0]  %s199, 1024, %s201, %s188, 128, 64, 4
        $region32: #{tpu_custom_call.1} parent=27 // pred_fallthru
          _
      $region28: #{tpu_custom_call.1} parent=5 // pred_fallthru
        _
      %p207 = scmp.le.s32.totalorder 1, %s17
      %p208 = scmp.lt.s32.totalorder %s17, 5
      %p209 = pnand %p207, %p208
      %p210 = pneg %p209
      // Predicated region
      $region33: #{tpu_custom_call.1} parent=5 // pred_check
        _
      $region34: #{tpu_custom_call.1} parent=5 // pred_check_branch
        %212 = sbr.rel (%p209) target = $region36
      $region35: #{tpu_custom_call.1} parent=5 // pred_region
        %s213 = ssub.s32 %s17, 1
        %s214 = sand.u32 %s44, 1
        %s215 = scalar_lea.sflag [#allocation3], %s214
        %s216 = sand.u32 %s44, 1
        %s217 = smul.addr %s216, 64
        %s218 = scalar_lea.vmem [#allocation2], %s217
        // Predicated region
        $region37: #{tpu_custom_call.1} parent=35 // pred_check
          %p219 = pneg %p57
        $region38: #{tpu_custom_call.1} parent=35 // pred_check_branch
          %221 = sbr.rel (%p219) target = $region40
        $region39: #{tpu_custom_call.1} parent=35 // pred_region
          %222 = dma.done %s215, 1024
        $region40: #{tpu_custom_call.1} parent=35 // pred_fallthru
          _
        // Predicated region
        $region41: #{tpu_custom_call.1} parent=35 // pred_check
          %p223 = pneg %p78
        $region42: #{tpu_custom_call.1} parent=35 // pred_check_branch
          %225 = sbr.rel (%p223) target = $region44
        $region43: #{tpu_custom_call.1} parent=35 // pred_region
          %226 = dma.done [#allocation6], 2048
        $region44: #{tpu_custom_call.1} parent=35 // pred_fallthru
          _
        %s227 = sand.u32 %s44, 1
        %s228 = scalar_lea.sflag [#allocation3], %s227
        %s229 = sand.u32 %s44, 1
        %s230 = smul.addr %s229, 64
        %s231 = scalar_lea.vmem [#allocation2], %s230
        %p232 = pneg %p57
        %p233 = pneg %p54
        %p234 = pneg %p78
        %p235 = pneg %p75
        %p236 = pneg %p99
        %p237 = pneg %p96
        %p238 = pneg %p120
        %p239 = pneg %p117
        %p240 = pneg %p146
        %p241 = pneg %p143
        %s242 = sand.u32 %s133, 1
        %s243 = scalar_lea.sflag [#allocation4], %s242
        %s244 = sand.u32 %s133, 1
        %s245 = smul.addr %s244, 128
        %s246 = scalar_lea.vmem [#allocation7], %s245
        %s247 = smul.u32 16, %s26
        %s248 = smul.u32 16, %s26
        %p250 = scmp.eq.s32.totalorder %s27, 0
        // Predicated region
        $region45: #{tpu_custom_call.1} parent=35 // pred_check
          %p251 = pneg %p250
        $region46: #{tpu_custom_call.1} parent=35 // pred_check_branch
          %253 = sbr.rel (%p251) target = $region48
        $region47: #{tpu_custom_call.1} parent=35 // pred_region
          %254 = vst [vmem:[%s246] sm:$0xff] 0.0
          %255 = vst [vmem:[%s246 + $0x8] sm:$0xff] 0.0
          %256 = vst [vmem:[%s246 + $0x10] sm:$0xff] 0.0
          %257 = vst [vmem:[%s246 + $0x18] sm:$0xff] 0.0
          %258 = vst [vmem:[%s246 + $0x20] sm:$0xff] 0.0
          %259 = vst [vmem:[%s246 + $0x28] sm:$0xff] 0.0
          %260 = vst [vmem:[%s246 + $0x30] sm:$0xff] 0.0
          %261 = vst [vmem:[%s246 + $0x38] sm:$0xff] 0.0
          %262 = vst [vmem:[%s246 + $0x40] sm:$0xff] 0.0
          %263 = vst [vmem:[%s246 + $0x48] sm:$0xff] 0.0
          %264 = vst [vmem:[%s246 + $0x50] sm:$0xff] 0.0
          %265 = vst [vmem:[%s246 + $0x58] sm:$0xff] 0.0
          %266 = vst [vmem:[%s246 + $0x60] sm:$0xff] 0.0
          %267 = vst [vmem:[%s246 + $0x68] sm:$0xff] 0.0
          %268 = vst [vmem:[%s246 + $0x70] sm:$0xff] 0.0
          %269 = vst [vmem:[%s246 + $0x78] sm:$0xff] 0.0
        $region48: #{tpu_custom_call.1} parent=35 // pred_fallthru
          _
        %s270 = smul.u32 %s27, 128
        %s271 = sshra.s32 %s270, 3
        %s272 = sand.u32 %s270, 7
        %s273 = smul.addr %s271, 4
        %s274 = scalar_lea.vmem [#allocation5], %s273
        %v275 = vld [vmem:[%s274] sm:$0xf]
        %v276 = vld [vmem:[%s274 + $0x4] sm:$0xf]
        %v277 = vld [vmem:[%s274 + $0x8] sm:$0xf]
        %v278 = vld [vmem:[%s274 + $0xc] sm:$0xf]
        %v279 = vld [vmem:[%s274 + $0x10] sm:$0xf]
        %v280 = vld [vmem:[%s274 + $0x14] sm:$0xf]
        %v281 = vld [vmem:[%s274 + $0x18] sm:$0xf]
        %v282 = vld [vmem:[%s274 + $0x1c] sm:$0xf]
        %v283 = vld [vmem:[%s274 + $0x20] sm:$0xf]
        %v284 = vld [vmem:[%s274 + $0x24] sm:$0xf]
        %v285 = vld [vmem:[%s274 + $0x28] sm:$0xf]
        %v286 = vld [vmem:[%s274 + $0x2c] sm:$0xf]
        %v287 = vld [vmem:[%s274 + $0x30] sm:$0xf]
        %v288 = vld [vmem:[%s274 + $0x34] sm:$0xf]
        %v289 = vld [vmem:[%s274 + $0x38] sm:$0xf]
        %v290 = vld [vmem:[%s274 + $0x3c] sm:$0xf]
        %v291 = vld [vmem:[%s246] sm:$0xff]
        %v292 = vld [vmem:[%s246 + $0x8] sm:$0xff]
        %v293 = vld [vmem:[%s246 + $0x10] sm:$0xff]
        %v294 = vld [vmem:[%s246 + $0x18] sm:$0xff]
        %v295 = vld [vmem:[%s246 + $0x20] sm:$0xff]
        %v296 = vld [vmem:[%s246 + $0x28] sm:$0xff]
        %v297 = vld [vmem:[%s246 + $0x30] sm:$0xff]
        %v298 = vld [vmem:[%s246 + $0x38] sm:$0xff]
        %v299 = vld [vmem:[%s246 + $0x40] sm:$0xff]
        %v300 = vld [vmem:[%s246 + $0x48] sm:$0xff]
        %v301 = vld [vmem:[%s246 + $0x50] sm:$0xff]
        %v302 = vld [vmem:[%s246 + $0x58] sm:$0xff]
        %v303 = vld [vmem:[%s246 + $0x60] sm:$0xff]
        %v304 = vld [vmem:[%s246 + $0x68] sm:$0xff]
        %v305 = vld [vmem:[%s246 + $0x70] sm:$0xff]
        %v306 = vld [vmem:[%s246 + $0x78] sm:$0xff]
        %v307 = vld [vmem:[%s218] sm:$0xf]
        %v308 = vld [vmem:[%s218 + $0x4] sm:$0xf]
        %v309 = vld [vmem:[%s218 + $0x8] sm:$0xf]
        %v310 = vld [vmem:[%s218 + $0xc] sm:$0xf]
        %v311 = vld [vmem:[%s218 + $0x10] sm:$0xf]
        %v312 = vld [vmem:[%s218 + $0x14] sm:$0xf]
        %v313 = vld [vmem:[%s218 + $0x18] sm:$0xf]
        %v314 = vld [vmem:[%s218 + $0x1c] sm:$0xf]
        %v315 = vld [vmem:[%s218 + $0x20] sm:$0xf]
        %v316 = vld [vmem:[%s218 + $0x24] sm:$0xf]
        %v317 = vld [vmem:[%s218 + $0x28] sm:$0xf]
        %v318 = vld [vmem:[%s218 + $0x2c] sm:$0xf]
        %v319 = vld [vmem:[%s218 + $0x30] sm:$0xf]
        %v320 = vld [vmem:[%s218 + $0x34] sm:$0xf]
        %v321 = vld [vmem:[%s218 + $0x38] sm:$0xf]
        %v322 = vld [vmem:[%s218 + $0x3c] sm:$0xf]
        %v339 = vunpack.c.l.b16 %v307
        %v340 = vunpack.c.l.b16 %v308
        %v341 = vunpack.c.l.b16 %v309
        %v342 = vunpack.c.l.b16 %v310
        %v343 = vunpack.c.l.b16 %v311
        %v344 = vunpack.c.l.b16 %v312
        %v345 = vunpack.c.l.b16 %v313
        %v346 = vunpack.c.l.b16 %v314
        %v347 = vunpack.c.l.b16 %v315
        %v348 = vunpack.c.l.b16 %v316
        %v349 = vunpack.c.l.b16 %v317
        %v350 = vunpack.c.l.b16 %v318
        %v351 = vunpack.c.l.b16 %v319
        %v352 = vunpack.c.l.b16 %v320
        %v353 = vunpack.c.l.b16 %v321
        %v354 = vunpack.c.l.b16 %v322
        %v355 = vpack.c.b16 %v340, %v339
        %v356 = vpack.c.b16 %v342, %v341
        %v357 = vpack.c.b16 %v344, %v343
        %v358 = vpack.c.b16 %v346, %v345
        %v359 = vpack.c.b16 %v348, %v347
        %v360 = vpack.c.b16 %v350, %v349
        %v361 = vpack.c.b16 %v352, %v351
        %v362 = vpack.c.b16 %v354, %v353
        %v387 = vunpack.c.l.b16 %v275
        %v388 = vunpack.c.l.b16 %v276
        %v389 = vunpack.c.l.b16 %v277
        %v390 = vunpack.c.l.b16 %v278
        %v391 = vunpack.c.l.b16 %v279
        %v392 = vunpack.c.l.b16 %v280
        %v393 = vunpack.c.l.b16 %v281
        %v394 = vunpack.c.l.b16 %v282
        %v395 = vunpack.c.l.b16 %v283
        %v396 = vunpack.c.l.b16 %v284
        %v397 = vunpack.c.l.b16 %v285
        %v398 = vunpack.c.l.b16 %v286
        %v399 = vunpack.c.l.b16 %v287
        %v400 = vunpack.c.l.b16 %v288
        %v401 = vunpack.c.l.b16 %v289
        %v402 = vunpack.c.l.b16 %v290
        %v403 = vpack.c.b16 %v388, %v387
        %v404 = vpack.c.b16 %v390, %v389
        %v405 = vpack.c.b16 %v392, %v391
        %v406 = vpack.c.b16 %v394, %v393
        %v407 = vpack.c.b16 %v396, %v395
        %v408 = vpack.c.b16 %v398, %v397
        %v409 = vpack.c.b16 %v400, %v399
        %v410 = vpack.c.b16 %v402, %v401
        %419 = vmatprep.subr.bf16.mxu0 0
        %420 = vmatpush1.bf16.msra.mxu0 %v410
        %421 = vmatprep.subr.bf16.mxu0 0
        %422 = vmatpush1.bf16.msra.mxu0 %v409
        %423 = vmatprep.subr.bf16.mxu0 0
        %424 = vmatpush1.bf16.msra.mxu0 %v408
        %425 = vmatprep.subr.bf16.mxu0 0
        %426 = vmatpush1.bf16.msra.mxu0 %v407
        %427 = vmatprep.subr.bf16.mxu0 0
        %428 = vmatpush1.bf16.msra.mxu0 %v406
        %429 = vmatprep.subr.bf16.mxu0 0
        %430 = vmatpush1.bf16.msra.mxu0 %v405
        %431 = vmatprep.subr.bf16.mxu0 0
        %432 = vmatpush1.bf16.msra.mxu0 %v404
        %433 = vmatprep.subr.bf16.mxu0 0
        %434 = vmatpush1.bf16.msra.mxu0 %v403
        %435 = vmatprep.subr.bf16.mxu0 0
        %436 = vmatpush2.bf16.msra.mxu0 0
        %437 = vmatprep.subr.bf16.mxu0 0
        %438 = vmatpush2.bf16.msra.mxu0 0
        %439 = vmatprep.subr.bf16.mxu0 0
        %440 = vmatpush2.bf16.msra.mxu0 0
        %441 = vmatprep.subr.bf16.mxu0 0
        %442 = vmatpush2.bf16.msra.mxu0 0
        %443 = vmatprep.subr.bf16.mxu0 0
        %444 = vmatpush2.bf16.msra.mxu0 0
        %445 = vmatprep.subr.bf16.mxu0 0
        %446 = vmatpush2.bf16.msra.mxu0 0
        %447 = vmatprep.subr.bf16.mxu0 0
        %448 = vmatpush2.bf16.msra.mxu0 0
        %449 = vmatprep.subr.bf16.mxu0 0
        %450 = vmatpush2.bf16.msra.mxu0 0
        %451 = vmatprep.mubr.bf16.mxu0 0
        %452 = vmatmul.mubr.bf16.gmra.mxu0 %v355
        %v453 = vpop.f32.mrf.mxu0
        %v454 = vadd.f32 0.0, %v453
        %v455 = vpop.f32.mrf.mxu0
        %v456 = vpop.f32.mrf.mxu0
        %v457 = vadd.f32 0.0, %v456
        %v458 = vpop.f32.mrf.mxu0
        %459 = vmatprep.mubr.bf16.mxu0 0
        %460 = vmatmul.mubr.bf16.gmra.mxu0 %v356
        %v461 = vpop.f32.mrf.mxu0
        %v462 = vadd.f32 0.0, %v461
        %v463 = vpop.f32.mrf.mxu0
        %v464 = vpop.f32.mrf.mxu0
        %v465 = vadd.f32 0.0, %v464
        %v466 = vpop.f32.mrf.mxu0
        %467 = vmatprep.mubr.bf16.mxu0 0
        %468 = vmatmul.mubr.bf16.gmra.mxu0 %v357
        %v469 = vpop.f32.mrf.mxu0
        %v470 = vadd.f32 0.0, %v469
        %v471 = vpop.f32.mrf.mxu0
        %v472 = vpop.f32.mrf.mxu0
        %v473 = vadd.f32 0.0, %v472
        %v474 = vpop.f32.mrf.mxu0
        %475 = vmatprep.mubr.bf16.mxu0 0
        %476 = vmatmul.mubr.bf16.gmra.mxu0 %v358
        %v477 = vpop.f32.mrf.mxu0
        %v478 = vadd.f32 0.0, %v477
        %v479 = vpop.f32.mrf.mxu0
        %v480 = vpop.f32.mrf.mxu0
        %v481 = vadd.f32 0.0, %v480
        %v482 = vpop.f32.mrf.mxu0
        %483 = vmatprep.mubr.bf16.mxu0 0
        %484 = vmatmul.mubr.bf16.gmra.mxu0 %v359
        %v485 = vpop.f32.mrf.mxu0
        %v486 = vadd.f32 0.0, %v485
        %v487 = vpop.f32.mrf.mxu0
        %v488 = vpop.f32.mrf.mxu0
        %v489 = vadd.f32 0.0, %v488
        %v490 = vpop.f32.mrf.mxu0
        %491 = vmatprep.mubr.bf16.mxu0 0
        %492 = vmatmul.mubr.bf16.gmra.mxu0 %v360
        %v493 = vpop.f32.mrf.mxu0
        %v494 = vadd.f32 0.0, %v493
        %v495 = vpop.f32.mrf.mxu0
        %v496 = vpop.f32.mrf.mxu0
        %v497 = vadd.f32 0.0, %v496
        %v498 = vpop.f32.mrf.mxu0
        %499 = vmatprep.mubr.bf16.mxu0 0
        %500 = vmatmul.mubr.bf16.gmra.mxu0 %v361
        %v501 = vpop.f32.mrf.mxu0
        %v502 = vadd.f32 0.0, %v501
        %v503 = vpop.f32.mrf.mxu0
        %v504 = vpop.f32.mrf.mxu0
        %v505 = vadd.f32 0.0, %v504
        %v506 = vpop.f32.mrf.mxu0
        %507 = vmatprep.mubr.bf16.mxu0 0
        %508 = vmatmul.mubr.bf16.gmra.mxu0 %v362
        %v509 = vpop.f32.mrf.mxu0
        %v510 = vadd.f32 0.0, %v509
        %v511 = vpop.f32.mrf.mxu0
        %v512 = vpop.f32.mrf.mxu0
        %v513 = vadd.f32 0.0, %v512
        %v514 = vpop.f32.mrf.mxu0
        %515 = vdwg.mxu0
        %v516 = vadd.f32 %v291, %v454
        %v517 = vadd.f32 %v292, %v457
        %v518 = vadd.f32 %v293, %v462
        %v519 = vadd.f32 %v294, %v465
        %v520 = vadd.f32 %v295, %v470
        %v521 = vadd.f32 %v296, %v473
        %v522 = vadd.f32 %v297, %v478
        %v523 = vadd.f32 %v298, %v481
        %v524 = vadd.f32 %v299, %v486
        %v525 = vadd.f32 %v300, %v489
        %v526 = vadd.f32 %v301, %v494
        %v527 = vadd.f32 %v302, %v497
        %v528 = vadd.f32 %v303, %v502
        %v529 = vadd.f32 %v304, %v505
        %v530 = vadd.f32 %v305, %v510
        %v531 = vadd.f32 %v306, %v513
        %532 = vst [vmem:[%s246] sm:$0xff] %v516
        %533 = vst [vmem:[%s246 + $0x8] sm:$0xff] %v517
        %534 = vst [vmem:[%s246 + $0x10] sm:$0xff] %v518
        %535 = vst [vmem:[%s246 + $0x18] sm:$0xff] %v519
        %536 = vst [vmem:[%s246 + $0x20] sm:$0xff] %v520
        %537 = vst [vmem:[%s246 + $0x28] sm:$0xff] %v521
        %538 = vst [vmem:[%s246 + $0x30] sm:$0xff] %v522
        %539 = vst [vmem:[%s246 + $0x38] sm:$0xff] %v523
        %540 = vst [vmem:[%s246 + $0x40] sm:$0xff] %v524
        %541 = vst [vmem:[%s246 + $0x48] sm:$0xff] %v525
        %542 = vst [vmem:[%s246 + $0x50] sm:$0xff] %v526
        %543 = vst [vmem:[%s246 + $0x58] sm:$0xff] %v527
        %544 = vst [vmem:[%s246 + $0x60] sm:$0xff] %v528
        %545 = vst [vmem:[%s246 + $0x68] sm:$0xff] %v529
        %546 = vst [vmem:[%s246 + $0x70] sm:$0xff] %v530
        %547 = vst [vmem:[%s246 + $0x78] sm:$0xff] %v531
        %p548 = scmp.eq.s32.totalorder %s27, 1
        // Predicated region
        $region49: #{tpu_custom_call.1} parent=35 // pred_check
          %p549 = pneg %p548
        $region50: #{tpu_custom_call.1} parent=35 // pred_check_branch
          %551 = sbr.rel (%p549) target = $region52
        $region51: #{tpu_custom_call.1} parent=35 // pred_region
          %v552 = vld [vmem:[%s246] sm:$0xff]
          %v553 = vld [vmem:[%s246 + $0x8] sm:$0xff]
          %v554 = vld [vmem:[%s246 + $0x10] sm:$0xff]
          %v555 = vld [vmem:[%s246 + $0x18] sm:$0xff]
          %v556 = vld [vmem:[%s246 + $0x20] sm:$0xff]
          %v557 = vld [vmem:[%s246 + $0x28] sm:$0xff]
          %v558 = vld [vmem:[%s246 + $0x30] sm:$0xff]
          %v559 = vld [vmem:[%s246 + $0x38] sm:$0xff]
          %v560 = vld [vmem:[%s246 + $0x40] sm:$0xff]
          %v561 = vld [vmem:[%s246 + $0x48] sm:$0xff]
          %v562 = vld [vmem:[%s246 + $0x50] sm:$0xff]
          %v563 = vld [vmem:[%s246 + $0x58] sm:$0xff]
          %v564 = vld [vmem:[%s246 + $0x60] sm:$0xff]
          %v565 = vld [vmem:[%s246 + $0x68] sm:$0xff]
          %v566 = vld [vmem:[%s246 + $0x70] sm:$0xff]
          %v567 = vld [vmem:[%s246 + $0x78] sm:$0xff]
          %v568 = vld [vmem:[%s2] sm:$0x1]
          %v570 = vlaneseq
          %v571 = vshrl.u32 %v570, 7
          %v572 = vsub.s32 0, %v571
          %v573 = vrot.slane %v568, %v572
          %v575 = vadd.f32 %v552, %v573
          %v576 = vadd.f32 %v553, %v573
          %v577 = vadd.f32 %v554, %v573
          %v578 = vadd.f32 %v555, %v573
          %v579 = vadd.f32 %v556, %v573
          %v580 = vadd.f32 %v557, %v573
          %v581 = vadd.f32 %v558, %v573
          %v582 = vadd.f32 %v559, %v573
          %v583 = vadd.f32 %v560, %v573
          %v584 = vadd.f32 %v561, %v573
          %v585 = vadd.f32 %v562, %v573
          %v586 = vadd.f32 %v563, %v573
          %v587 = vadd.f32 %v564, %v573
          %v588 = vadd.f32 %v565, %v573
          %v589 = vadd.f32 %v566, %v573
          %v590 = vadd.f32 %v567, %v573
          %vm591 = vcmp.gt.f32.partialorder %v575, 0.0
          %vm592 = vcmp.gt.f32.partialorder %v576, 0.0
          %vm593 = vcmp.gt.f32.partialorder %v577, 0.0
          %vm594 = vcmp.gt.f32.partialorder %v578, 0.0
          %vm595 = vcmp.gt.f32.partialorder %v579, 0.0
          %vm596 = vcmp.gt.f32.partialorder %v580, 0.0
          %vm597 = vcmp.gt.f32.partialorder %v581, 0.0
          %vm598 = vcmp.gt.f32.partialorder %v582, 0.0
          %vm599 = vcmp.gt.f32.partialorder %v583, 0.0
          %vm600 = vcmp.gt.f32.partialorder %v584, 0.0
          %vm601 = vcmp.gt.f32.partialorder %v585, 0.0
          %vm602 = vcmp.gt.f32.partialorder %v586, 0.0
          %vm603 = vcmp.gt.f32.partialorder %v587, 0.0
          %vm604 = vcmp.gt.f32.partialorder %v588, 0.0
          %vm605 = vcmp.gt.f32.partialorder %v589, 0.0
          %vm606 = vcmp.gt.f32.partialorder %v590, 0.0
          %v607 = vld [vmem:[%s3] sm:$0x1]
          %v609 = vlaneseq
          %v610 = vshrl.u32 %v609, 7
          %v611 = vsub.s32 0, %v610
          %v612 = vrot.slane %v607, %v611
          %v614 = vmul.f32 %v612, %v575
          %v615 = vmul.f32 %v612, %v576
          %v616 = vmul.f32 %v612, %v577
          %v617 = vmul.f32 %v612, %v578
          %v618 = vmul.f32 %v612, %v579
          %v619 = vmul.f32 %v612, %v580
          %v620 = vmul.f32 %v612, %v581
          %v621 = vmul.f32 %v612, %v582
          %v622 = vmul.f32 %v612, %v583
          %v623 = vmul.f32 %v612, %v584
          %v624 = vmul.f32 %v612, %v585
          %v625 = vmul.f32 %v612, %v586
          %v626 = vmul.f32 %v612, %v587
          %v627 = vmul.f32 %v612, %v588
          %v628 = vmul.f32 %v612, %v589
          %v629 = vmul.f32 %v612, %v590
          %v630 = vsel %vm591, %v575, %v614
          %v631 = vsel %vm592, %v576, %v615
          %v632 = vsel %vm593, %v577, %v616
          %v633 = vsel %vm594, %v578, %v617
          %v634 = vsel %vm595, %v579, %v618
          %v635 = vsel %vm596, %v580, %v619
          %v636 = vsel %vm597, %v581, %v620
          %v637 = vsel %vm598, %v582, %v621
          %v638 = vsel %vm599, %v583, %v622
          %v639 = vsel %vm600, %v584, %v623
          %v640 = vsel %vm601, %v585, %v624
          %v641 = vsel %vm602, %v586, %v625
          %v642 = vsel %vm603, %v587, %v626
          %v643 = vsel %vm604, %v588, %v627
          %v644 = vsel %vm605, %v589, %v628
          %v645 = vsel %vm606, %v590, %v629
          %646 = vst [vmem:[%s246] sm:$0xff] %v630
          %647 = vst [vmem:[%s246 + $0x8] sm:$0xff] %v631
          %648 = vst [vmem:[%s246 + $0x10] sm:$0xff] %v632
          %649 = vst [vmem:[%s246 + $0x18] sm:$0xff] %v633
          %650 = vst [vmem:[%s246 + $0x20] sm:$0xff] %v634
          %651 = vst [vmem:[%s246 + $0x28] sm:$0xff] %v635
          %652 = vst [vmem:[%s246 + $0x30] sm:$0xff] %v636
          %653 = vst [vmem:[%s246 + $0x38] sm:$0xff] %v637
          %654 = vst [vmem:[%s246 + $0x40] sm:$0xff] %v638
          %655 = vst [vmem:[%s246 + $0x48] sm:$0xff] %v639
          %656 = vst [vmem:[%s246 + $0x50] sm:$0xff] %v640
          %657 = vst [vmem:[%s246 + $0x58] sm:$0xff] %v641
          %658 = vst [vmem:[%s246 + $0x60] sm:$0xff] %v642
          %659 = vst [vmem:[%s246 + $0x68] sm:$0xff] %v643
          %660 = vst [vmem:[%s246 + $0x70] sm:$0xff] %v644
          %661 = vst [vmem:[%s246 + $0x78] sm:$0xff] %v645
        $region52: #{tpu_custom_call.1} parent=35 // pred_fallthru
          _
        %s662 = sand.u32 %s133, 1
        %s663 = scalar_lea.sflag [#allocation4], %s662
        %s664 = sand.u32 %s133, 1
        %s665 = smul.addr %s664, 128
        %s666 = scalar_lea.vmem [#allocation7], %s665
        // Predicated region
        $region53: #{tpu_custom_call.1} parent=35 // pred_check
          %p667 = pneg %p143
        $region54: #{tpu_custom_call.1} parent=35 // pred_check_branch
          %669 = sbr.rel (%p667) target = $region56
        $region55: #{tpu_custom_call.1} parent=35 // pred_region
          %s670 = smul.u32 16, %s26
          %s672 = ssub.s32 2048, 2048
          %673 = vsyncadd %s663, %s672
          %s674 = smul.addr %s670, 128
          %s675 = scalar_lea.hbm %s4, %s674
          %s676 = sshll.u32 %s666, 4
          %s677 = int_to_ptr.vmem [resolvable:$true] %s676
          %682 = dma.vmem_to_hbm [thread:$0]  %s677, 2048, %s675, %s663, 128, 128, 8
        $region56: #{tpu_custom_call.1} parent=35 // pred_fallthru
          _
      $region36: #{tpu_custom_call.1} parent=5 // pred_fallthru
        _
      %p683 = scmp.le.s32.totalorder 2, %s17
      // Predicated region
      $region57: #{tpu_custom_call.1} parent=5 // pred_check
        %p684 = pneg %p683
      $region58: #{tpu_custom_call.1} parent=5 // pred_check_branch
        %686 = sbr.rel (%p684) target = $region60
      $region59: #{tpu_custom_call.1} parent=5 // pred_region
        %s687 = ssub.s32 %s17, 2
        // Predicated region
        $region61: #{tpu_custom_call.1} parent=59 // pred_check
          %p688 = pneg %p149
        $region62: #{tpu_custom_call.1} parent=59 // pred_check_branch
          %690 = sbr.rel (%p688) target = $region64
        $region63: #{tpu_custom_call.1} parent=59 // pred_region
          %s691 = sand.u32 %s134, 1
          %s692 = scalar_lea.sflag [#allocation4], %s691
          %s693 = sand.u32 %s134, 1
          %s694 = smul.addr %s693, 128
          %s695 = scalar_lea.vmem [#allocation7], %s694
          %696 = dma.done %s692, 2048
        $region64: #{tpu_custom_call.1} parent=59 // pred_fallthru
          _
      $region60: #{tpu_custom_call.1} parent=5 // pred_fallthru
        _
    $region6: #{tpu_custom_call.1} parent=1 // loop_footer
      %s21 = sadd.s32 1, %s17
    $region7: #{tpu_custom_call.1} parent=1 // loop_footer_branch
      %16 = sbr.rel target = $region3
    $region8: #{tpu_custom_call.1} parent=1 // loop_exit
      _
    %697 = vsyncpa [#allocation3], 1
    %s698 = scalar_lea.sflag [#allocation3], 1
    %699 = vsyncpa %s698, 1
    %700 = vsyncpa [#allocation6], 1
    %701 = vsyncpa [#allocation4], 1
    %s702 = scalar_lea.sflag [#allocation4], 1
    %703 = vsyncpa %s702, 1

</llo_original>
